<compile_context>
chip_gen: v6e
topology: v6e:2x2x1
jax: 0.10.0
libtpu: 0.0.40
codegen_flags: <defaults>
</compile_context>

<pallas_src>
import jax
import jax.numpy as jnp
from jax.experimental import pallas as pl
from jax.experimental.pallas import tpu as pltpu

HIDDEN = 128


def _round_up(n, m):
    return ((n + m - 1) // m) * m


def _default_compute_dtype():
    """bf16 MXU operands on v5e and older (no cheap f32 matmul); f32 on v6e/v7x."""
    try:
        kind = jax.devices()[0].device_kind.lower()
    except Exception:
        return jnp.bfloat16
    if any(tag in kind for tag in ("v2", "v3", "v4", "v5")):
        return jnp.bfloat16
    return jnp.float32


def dqn_kernel(x_ref, w1_ref, b1_ref, w2_ref, b2_ref, w3_ref, b3_ref, o_ref):
    # Cast (if any) happens here, in VMEM only; accumulation stays f32.
    x = x_ref[...].astype(w1_ref.dtype)
    # Layer 1: Linear + ReLU.
    h1 = jnp.dot(x, w1_ref[...], preferred_element_type=jnp.float32)
    h1 = jnp.maximum(h1 + b1_ref[...], 0.0)
    # Layer 2: Linear + ReLU.
    h2 = jnp.dot(h1.astype(w2_ref.dtype), w2_ref[...],
                 preferred_element_type=jnp.float32)
    h2 = jnp.maximum(h2 + b2_ref[...], 0.0)
    # Output layer: Linear (no activation).
    out = jnp.dot(h2.astype(w3_ref.dtype), w3_ref[...],
                  preferred_element_type=jnp.float32)
    o_ref[...] = (out + b3_ref[...]).astype(o_ref.dtype)


def dqn_forward(x, w1, b1, w2, b2, w3, b3, *, tb=None, compute_dtype=None):
    """relu(x@w1+b1) -> relu(.@w2+b2) -> .@w3+b3.

    x: (B, obs). Weights w_i: (in, out) (transposed PyTorch layout),
    biases b_i: (1, out). Returns (B, actions) f32.
    """
    B, obs = x.shape
    H = w1.shape[1]
    A = w3.shape[1]

    if compute_dtype is None:
        compute_dtype = _default_compute_dtype()

    # Weights are tiny (~96 KB) — cast once in the wrapper, keep VMEM-resident.
    w1c = w1.astype(compute_dtype)
    w2c = w2.astype(compute_dtype)
    w3c = w3.astype(compute_dtype)
    # Biases stay f32: they are added to the f32 accumulator.
    b1c = b1.reshape(1, H).astype(jnp.float32)
    b2c = b2.reshape(1, H).astype(jnp.float32)
    b3c = b3.reshape(1, A).astype(jnp.float32)

    # Batch tiling:
    #  - tiny/medium batches: single un-tiled block (block == full dims, so no
    #    alignment constraint and no batch padding / extra grid-step overhead).
    #  - large batches: tiles of up to 2048 rows (amortizes the ~0.35 us/step
    #    overhead), sized to give >= 2 tiles so v7x's two TensorCores both work.
    #    Pallas masks the trailing partial tile, so no batch padding is needed.
    if tb is None:
        if B <= 512:
            tb = B
        else:
            tb = min(2048, _round_up(pl.cdiv(B, 2), 256))
    n_tiles = pl.cdiv(B, tb)

    def resident(shape):
        # Loaded once, reused for every batch tile (constant index_map).
        return pl.BlockSpec(shape, lambda i: tuple(0 for _ in shape))

    w_itemsize = jnp.dtype(compute_dtype).itemsize
    flops = 2 * B * (obs * H + H * H + H * A)
    bytes_accessed = (
        B * obs * x.dtype.itemsize                       # x (native layout)
        + (w1c.size + w2c.size + w3c.size) * w_itemsize  # resident weights
        + (b1c.size + b2c.size + b3c.size) * 4           # biases (f32)
        + B * A * 4                                      # output (f32)
    )

    return pl.pallas_call(
        dqn_kernel,
        out_shape=jax.ShapeDtypeStruct((B, A), jnp.float32),
        grid=(n_tiles,),
        in_specs=[
            pl.BlockSpec((tb, obs), lambda i: (i, 0)),    # x: streamed per tile
            resident((obs, H)), resident((1, H)),         # layer 1
            resident((H, H)), resident((1, H)),           # layer 2
            resident((H, A)), resident((1, A)),           # output layer
        ],
        out_specs=pl.BlockSpec((tb, A), lambda i: (i, 0)),
        compiler_params=pltpu.CompilerParams(
            dimension_semantics=("parallel",),  # megacore batch sharding on v7x
        ),
        cost_estimate=pl.CostEstimate(
            flops=flops, transcendentals=0, bytes_accessed=bytes_accessed),
    )(x, w1c, b1c, w2c, b2c, w3c, b3c)


def init_params(key, obs_size, action_size):
    """Deterministic init mimicking nn.Linear's uniform(-1/sqrt(fan_in), 1/sqrt(fan_in))."""
    ks = jax.random.split(key, 6)

    def linear(kw, kb, fan_in, fan_out):
        bound = 1.0 / jnp.sqrt(fan_in)
        w = jax.random.uniform(kw, (fan_in, fan_out), jnp.float32, -bound, bound)
        b = jax.random.uniform(kb, (1, fan_out), jnp.float32, -bound, bound)
        return w, b

    w1, b1 = linear(ks[0], ks[1], obs_size, HIDDEN)
    w2, b2 = linear(ks[2], ks[3], HIDDEN, HIDDEN)
    w3, b3 = linear(ks[4], ks[5], HIDDEN, action_size)
    return w1, b1, w2, b2, w3, b3


# TODO(synk): the PyTorch module also owns an Adam optimizer / .to(device); that is
# training-state machinery, not part of the forward pass, so it is not translated.

if __name__ == "__main__":
    OBS_SIZE = 16
    ACTION_SIZE = 8
    BATCH = 8

    key = jax.random.PRNGKey(0)
    k_x, k_p = jax.random.split(key)
    x = jax.random.normal(k_x, (BATCH, OBS_SIZE), jnp.float32)
    params = init_params(k_p, OBS_SIZE, ACTION_SIZE)

    out = jax.block_until_ready(dqn_forward(x, *params))

    # Reference in pure f32 JAX (PyTorch semantics). Tolerance covers the bf16
    # MXU-operand path used on v5e-and-older chips.
    w1, b1, w2, b2, w3, b3 = params
    h = jnp.maximum(x @ w1 + b1, 0.0)
    h = jnp.maximum(h @ w2 + b2, 0.0)
    ref = h @ w3 + b3

    assert out.shape == (BATCH, ACTION_SIZE)
    max_err = float(jnp.max(jnp.abs(out - ref)))
    assert jnp.allclose(out, ref, atol=3e-2, rtol=3e-2), f"max abs err {max_err}"

    print("KERNEL_OK")
</pallas_src>

<mosaic_0001>
module attributes {stable_mosaic.version = 11 : i64} {
  func.func @dqn_kernel(%arg0: i32, %arg1: memref<8x16xf32, #tpu.memory_space<vmem>>, %arg2: memref<16x128xf32, #tpu.memory_space<vmem>>, %arg3: memref<1x128xf32, #tpu.memory_space<vmem>>, %arg4: memref<128x128xf32, #tpu.memory_space<vmem>>, %arg5: memref<1x128xf32, #tpu.memory_space<vmem>>, %arg6: memref<128x8xf32, #tpu.memory_space<vmem>>, %arg7: memref<1x8xf32, #tpu.memory_space<vmem>>, %arg8: memref<8x8xf32, #tpu.memory_space<vmem>>) attributes {dimension_semantics = [#tpu.dimension_semantics<parallel>], iteration_bounds = array<i64: 1>, scalar_prefetch = 0 : i64, scratch_operands = 0 : i64, tpu.core_type = #tpu.core_type<tc>, window_params = [{transform_indices = @transform_0, window_bounds = array<i64: 8, 16>}, {pipeline_mode = #tpu.pipeline_mode<synchronous>, transform_indices = @transform_1, window_bounds = array<i64: 16, 128>}, {pipeline_mode = #tpu.pipeline_mode<synchronous>, transform_indices = @transform_2, window_bounds = array<i64: 1, 128>}, {pipeline_mode = #tpu.pipeline_mode<synchronous>, transform_indices = @transform_3, window_bounds = array<i64: 128, 128>}, {pipeline_mode = #tpu.pipeline_mode<synchronous>, transform_indices = @transform_4, window_bounds = array<i64: 1, 128>}, {pipeline_mode = #tpu.pipeline_mode<synchronous>, transform_indices = @transform_5, window_bounds = array<i64: 128, 8>}, {pipeline_mode = #tpu.pipeline_mode<synchronous>, transform_indices = @transform_6, window_bounds = array<i64: 1, 8>}, {transform_indices = @transform_7, window_bounds = array<i64: 8, 8>}]} {
    %c0 = arith.constant 0 : index
    %c0_0 = arith.constant 0 : index
    %0 = vector.load %arg1[%c0, %c0_0] : memref<8x16xf32, #tpu.memory_space<vmem>>, vector<8x16xf32>
    %c0_1 = arith.constant 0 : index
    %c0_2 = arith.constant 0 : index
    %1 = vector.load %arg2[%c0_1, %c0_2] : memref<16x128xf32, #tpu.memory_space<vmem>>, vector<16x128xf32>
    %cst = arith.constant dense<0.000000e+00> : vector<8x128xf32>
    %2 = tpu.matmul %0, %1, %cst {dimension_numbers = #tpu.dot_dimension_numbers<[1], [0], [0], [1], [0, 0, 1, 1], [], []>} : vector<8x16xf32>, vector<16x128xf32>, vector<8x128xf32> -> vector<8x128xf32>
    %c0_3 = arith.constant 0 : index
    %c0_4 = arith.constant 0 : index
    %3 = vector.load %arg3[%c0_3, %c0_4] : memref<1x128xf32, #tpu.memory_space<vmem>>, vector<1x128xf32>
    %4 = vector.broadcast %3 : vector<1x128xf32> to vector<8x128xf32>
    %5 = arith.addf %2, %4 : vector<8x128xf32>
    %cst_5 = arith.constant 0.000000e+00 : f32
    %6 = vector.broadcast %cst_5 : f32 to vector<8x128xf32>
    %7 = arith.maximumf %5, %6 : vector<8x128xf32>
    %c0_6 = arith.constant 0 : index
    %c0_7 = arith.constant 0 : index
    %8 = vector.load %arg4[%c0_6, %c0_7] : memref<128x128xf32, #tpu.memory_space<vmem>>, vector<128x128xf32>
    %cst_8 = arith.constant dense<0.000000e+00> : vector<8x128xf32>
    %9 = tpu.matmul %7, %8, %cst_8 {dimension_numbers = #tpu.dot_dimension_numbers<[1], [0], [0], [1], [0, 0, 1, 1], [], []>} : vector<8x128xf32>, vector<128x128xf32>, vector<8x128xf32> -> vector<8x128xf32>
    %c0_9 = arith.constant 0 : index
    %c0_10 = arith.constant 0 : index
    %10 = vector.load %arg5[%c0_9, %c0_10] : memref<1x128xf32, #tpu.memory_space<vmem>>, vector<1x128xf32>
    %11 = vector.broadcast %10 : vector<1x128xf32> to vector<8x128xf32>
    %12 = arith.addf %9, %11 : vector<8x128xf32>
    %cst_11 = arith.constant 0.000000e+00 : f32
    %13 = vector.broadcast %cst_11 : f32 to vector<8x128xf32>
    %14 = arith.maximumf %12, %13 : vector<8x128xf32>
    %c0_12 = arith.constant 0 : index
    %c0_13 = arith.constant 0 : index
    %15 = vector.load %arg6[%c0_12, %c0_13] : memref<128x8xf32, #tpu.memory_space<vmem>>, vector<128x8xf32>
    %cst_14 = arith.constant dense<0.000000e+00> : vector<8x8xf32>
    %16 = tpu.matmul %14, %15, %cst_14 {dimension_numbers = #tpu.dot_dimension_numbers<[1], [0], [0], [1], [0, 0, 1, 1], [], []>} : vector<8x128xf32>, vector<128x8xf32>, vector<8x8xf32> -> vector<8x8xf32>
    %c0_15 = arith.constant 0 : index
    %c0_16 = arith.constant 0 : index
    %17 = vector.load %arg7[%c0_15, %c0_16] : memref<1x8xf32, #tpu.memory_space<vmem>>, vector<1x8xf32>
    %18 = vector.broadcast %17 : vector<1x8xf32> to vector<8x8xf32>
    %19 = arith.addf %16, %18 : vector<8x8xf32>
    %c0_17 = arith.constant 0 : index
    %c0_18 = arith.constant 0 : index
    %20 = vector.load %arg8[%c0_17, %c0_18] : memref<8x8xf32, #tpu.memory_space<vmem>>, vector<8x8xf32>
    tpu.vector_store %arg8[%c0_17, %c0_18], %19 {strides = array<i32>} : memref<8x8xf32, #tpu.memory_space<vmem>>, vector<8x8xf32>,
    return
  }
  func.func @transform_0(%arg0: i32) -> (i32, i32) {
    %c0_i32 = arith.constant 0 : i32
    %c0_i32_0 = arith.constant 0 : i32
    return %arg0, %c0_i32 : i32, i32
  }
  func.func @transform_1(%arg0: i32) -> (i32, i32) {
    %c0_i32 = arith.constant 0 : i32
    %c0_i32_0 = arith.constant 0 : i32
    %c0_i32_1 = arith.constant 0 : i32
    return %c0_i32, %c0_i32_0 : i32, i32
  }
  func.func @transform_2(%arg0: i32) -> (i32, i32) {
    %c0_i32 = arith.constant 0 : i32
    %c0_i32_0 = arith.constant 0 : i32
    %c0_i32_1 = arith.constant 0 : i32
    return %c0_i32, %c0_i32_0 : i32, i32
  }
  func.func @transform_3(%arg0: i32) -> (i32, i32) {
    %c0_i32 = arith.constant 0 : i32
    %c0_i32_0 = arith.constant 0 : i32
    %c0_i32_1 = arith.constant 0 : i32
    return %c0_i32, %c0_i32_0 : i32, i32
  }
  func.func @transform_4(%arg0: i32) -> (i32, i32) {
    %c0_i32 = arith.constant 0 : i32
    %c0_i32_0 = arith.constant 0 : i32
    %c0_i32_1 = arith.constant 0 : i32
    return %c0_i32, %c0_i32_0 : i32, i32
  }
  func.func @transform_5(%arg0: i32) -> (i32, i32) {
    %c0_i32 = arith.constant 0 : i32
    %c0_i32_0 = arith.constant 0 : i32
    %c0_i32_1 = arith.constant 0 : i32
    return %c0_i32, %c0_i32_0 : i32, i32
  }
  func.func @transform_6(%arg0: i32) -> (i32, i32) {
    %c0_i32 = arith.constant 0 : i32
    %c0_i32_0 = arith.constant 0 : i32
    %c0_i32_1 = arith.constant 0 : i32
    return %c0_i32, %c0_i32_0 : i32, i32
  }
  func.func @transform_7(%arg0: i32) -> (i32, i32) {
    %c0_i32 = arith.constant 0 : i32
    %c0_i32_0 = arith.constant 0 : i32
    return %arg0, %c0_i32 : i32, i32
  }
}

</mosaic_0001>

<llo_original>
// kernel: tpu_custom_call.1
$region0: #{tpu_custom_call.1}
  #allocation0 [shape = 'u32[]', space=smem, size = 0x4, offset = 0x4, fixed_abs, tag = 'smem constant byte address 0x4 - core index']
  #allocation1 [shape = 'u32[144,128]{1,0:T(1,128)}', space=vmem, size = 0x12000, scoped, tag = 'internal scratch']
  %s0 = inlined_call_operand.vmem [shape: f32[8,16], index: 0, kind: input, shape index: {}]
  %s1 = inlined_call_operand.hbm [shape: f32[16,128], index: 1, kind: input, shape index: {}]
  %s2 = inlined_call_operand.vmem [shape: f32[1,128], index: 2, kind: input, shape index: {}]
  %s3 = inlined_call_operand.vmem [shape: f32[128,128], index: 3, kind: input, shape index: {}]
  %s4 = inlined_call_operand.hbm [shape: f32[1,128], index: 4, kind: input, shape index: {}]
  %s5 = inlined_call_operand.vmem [shape: f32[128,8], index: 5, kind: input, shape index: {}]
  %s6 = inlined_call_operand.vmem [shape: f32[1,8], index: 6, kind: input, shape index: {}]
  %s7 = inlined_call_operand.hbm [shape: f32[8,8], index: 7, kind: output, shape index: {}]
  %s8 = sld [smem:[#allocation0]]
  $region46: #{tpu_custom_call.1} parent=0
    _
  %s10 = ssub.s32 1, %s8
  %s11 = scalar_select 0, %s10, %s8
  $region1: #{tpu_custom_call.1} parent=0
    #allocation2 [shape = 'u8[8192]{0}', space=vmem, size = 0x2000, scoped, tag = 'input window, operand 1, single buffered']
    #allocation3 [shape = 's32[1]{0}', space=sflag, size = 0x4, scoped, tag = 'scoped memory for tpu_custom_call.1']
    #allocation4 [shape = 's32[1]{0}', space=sflag, size = 0x4, scoped, tag = 'scoped memory for tpu_custom_call.1']
    #allocation5 [shape = 'u8[512]{0}', space=vmem, size = 0x400, scoped, tag = 'input window, operand 4, single buffered']
    #allocation6 [shape = 's32[1]{0}', space=sflag, size = 0x4, scoped, tag = 'scoped memory for tpu_custom_call.1']
    #allocation7 [shape = 'u8[4096]{0}', space=vmem, size = 0x1000, scoped, tag = 'output window, operand 0, single buffered']
    %12 = vsyncpa [#allocation3], 0
    %13 = vsyncpa [#allocation6], 0
    %14 = vsyncpa [#allocation4], 0
    // Predicated region
    $region2: #{tpu_custom_call.1} parent=1 // pred_check
      _
    $region3: #{tpu_custom_call.1} parent=1 // pred_check_branch
      %16 = sbr.rel (0) target = $region5
    $region4: #{tpu_custom_call.1} parent=1 // pred_region
      _
    $region5: #{tpu_custom_call.1} parent=1 // pred_fallthru
      _
    // Predicated region
    $region6: #{tpu_custom_call.1} parent=1 // pred_check
      _
    $region7: #{tpu_custom_call.1} parent=1 // pred_check_branch
      %18 = sbr.rel (0) target = $region9
    $region8: #{tpu_custom_call.1} parent=1 // pred_region
      %s20 = ssub.s32 256, 256
      %21 = vsyncadd [#allocation3], %s20
      %s22 = sshll.u32 [#allocation2], 4
      %s23 = int_to_ptr.vmem [resolvable:$true] %s22
      %28 = dma.hbm_to_vmem [thread:$0]  %s1, 256, %s23, [#allocation3], 128, 128, 8
    $region9: #{tpu_custom_call.1} parent=1 // pred_fallthru
      _
    // Predicated region
    $region10: #{tpu_custom_call.1} parent=1 // pred_check
      _
    $region11: #{tpu_custom_call.1} parent=1 // pred_check_branch
      %30 = sbr.rel (0) target = $region13
    $region12: #{tpu_custom_call.1} parent=1 // pred_region
      _
    $region13: #{tpu_custom_call.1} parent=1 // pred_fallthru
      _
    // Predicated region
    $region14: #{tpu_custom_call.1} parent=1 // pred_check
      _
    $region15: #{tpu_custom_call.1} parent=1 // pred_check_branch
      %32 = sbr.rel (0) target = $region17
    $region16: #{tpu_custom_call.1} parent=1 // pred_region
      _
    $region17: #{tpu_custom_call.1} parent=1 // pred_fallthru
      _
    // Predicated region
    $region18: #{tpu_custom_call.1} parent=1 // pred_check
      _
    $region19: #{tpu_custom_call.1} parent=1 // pred_check_branch
      %34 = sbr.rel (0) target = $region21
    $region20: #{tpu_custom_call.1} parent=1 // pred_region
      %s36 = ssub.s32 16, 16
      %37 = vsyncadd [#allocation6], %s36
      %s39 = sshll.u32 [#allocation5], 4
      %s40 = int_to_ptr.vmem [resolvable:$true] %s39
      %42 = dma.hbm_to_vmem [thread:$0]  %s4, 16, %s40, [#allocation6]
    $region21: #{tpu_custom_call.1} parent=1 // pred_fallthru
      _
    // Predicated region
    $region22: #{tpu_custom_call.1} parent=1 // pred_check
      _
    $region23: #{tpu_custom_call.1} parent=1 // pred_check_branch
      %44 = sbr.rel (0) target = $region25
    $region24: #{tpu_custom_call.1} parent=1 // pred_region
      _
    $region25: #{tpu_custom_call.1} parent=1 // pred_fallthru
      _
    // Predicated region
    $region26: #{tpu_custom_call.1} parent=1 // pred_check
      _
    $region27: #{tpu_custom_call.1} parent=1 // pred_check_branch
      %46 = sbr.rel (0) target = $region29
    $region28: #{tpu_custom_call.1} parent=1 // pred_region
      _
    $region29: #{tpu_custom_call.1} parent=1 // pred_fallthru
      _
    // Predicated region
    $region30: #{tpu_custom_call.1} parent=1 // pred_check
      _
    $region31: #{tpu_custom_call.1} parent=1 // pred_check_branch
      %48 = sbr.rel (0) target = $region33
    $region32: #{tpu_custom_call.1} parent=1 // pred_region
      %49 = dma.done [#allocation3], 256
    $region33: #{tpu_custom_call.1} parent=1 // pred_fallthru
      _
    // Predicated region
    $region34: #{tpu_custom_call.1} parent=1 // pred_check
      _
    $region35: #{tpu_custom_call.1} parent=1 // pred_check_branch
      %51 = sbr.rel (0) target = $region37
    $region36: #{tpu_custom_call.1} parent=1 // pred_region
      %52 = dma.done [#allocation6], 16
    $region37: #{tpu_custom_call.1} parent=1 // pred_fallthru
      _
    %v53 = vld [vmem:[%s0] sm:$0xff]
    %v54 = vld [vmem:[#allocation2] sm:$0xff]
    %v55 = vld [vmem:[#allocation2 + $0x8] sm:$0xff]
    %v56 = vld [vmem:[%s2] sm:$0x1]
    %v58 = vlaneseq
    %v59 = vshrl.u32 %v58, 7
    %v60 = vsub.s32 0, %v59
    %v61 = vrot.slane %v56, %v60
    %vm63 = vcmask 130048
    %v65 = vsel %vm63, %v53, 0
    %67 = vmatprep.subr.mxu0 0.0
    %68 = vmatpush1.msra.mxu0 0.0
    %69 = vmatprep.subr.mxu0 0.0
    %70 = vmatpush1.msra.mxu0 0.0
    %71 = vmatprep.subr.mxu0 0.0
    %72 = vmatpush1.msra.mxu0 0.0
    %73 = vmatprep.subr.mxu0 0.0
    %74 = vmatpush1.msra.mxu0 0.0
    %75 = vmatprep.subr.mxu0 0.0
    %76 = vmatpush1.msra.mxu0 0.0
    %77 = vmatprep.subr.mxu0 0.0
    %78 = vmatpush1.msra.mxu0 0.0
    %79 = vmatprep.subr.mxu0 0.0
    %80 = vmatpush1.msra.mxu0 0.0
    %81 = vmatprep.subr.mxu0 0.0
    %82 = vmatpush1.msra.mxu0 0.0
    %83 = vmatprep.subr.mxu0 0.0
    %84 = vmatpush1.msra.mxu0 0.0
    %85 = vmatprep.subr.mxu0 0.0
    %86 = vmatpush1.msra.mxu0 0.0
    %87 = vmatprep.subr.mxu0 0.0
    %88 = vmatpush1.msra.mxu0 0.0
    %89 = vmatprep.subr.mxu0 0.0
    %90 = vmatpush1.msra.mxu0 0.0
    %91 = vmatprep.subr.mxu0 0.0
    %92 = vmatpush1.msra.mxu0 0.0
    %93 = vmatprep.subr.mxu0 0.0
    %94 = vmatpush1.msra.mxu0 0.0
    %95 = vmatprep.subr.mxu0 0.0
    %96 = vmatpush1.msra.mxu0 %v55
    %97 = vmatprep.subr.mxu0 0.0
    %98 = vmatpush1.msra.mxu0 %v54
    %99 = vmatprep.subr.mxu0 0.0
    %100 = vmatpush2.msra.mxu0 0.0
    %101 = vmatprep.subr.mxu0 0.0
    %102 = vmatpush2.msra.mxu0 0.0
    %103 = vmatprep.subr.mxu0 0.0
    %104 = vmatpush2.msra.mxu0 0.0
    %105 = vmatprep.subr.mxu0 0.0
    %106 = vmatpush2.msra.mxu0 0.0
    %107 = vmatprep.subr.mxu0 0.0
    %108 = vmatpush2.msra.mxu0 0.0
    %109 = vmatprep.subr.mxu0 0.0
    %110 = vmatpush2.msra.mxu0 0.0
    %111 = vmatprep.subr.mxu0 0.0
    %112 = vmatpush2.msra.mxu0 0.0
    %113 = vmatprep.subr.mxu0 0.0
    %114 = vmatpush2.msra.mxu0 0.0
    %115 = vmatprep.subr.mxu0 0.0
    %116 = vmatpush2.msra.mxu0 0.0
    %117 = vmatprep.subr.mxu0 0.0
    %118 = vmatpush2.msra.mxu0 0.0
    %119 = vmatprep.subr.mxu0 0.0
    %120 = vmatpush2.msra.mxu0 0.0
    %121 = vmatprep.subr.mxu0 0.0
    %122 = vmatpush2.msra.mxu0 0.0
    %123 = vmatprep.subr.mxu0 0.0
    %124 = vmatpush2.msra.mxu0 0.0
    %125 = vmatprep.subr.mxu0 0.0
    %126 = vmatpush2.msra.mxu0 0.0
    %127 = vmatprep.subr.mxu0 0.0
    %128 = vmatpush2.msra.mxu0 0.0
    %129 = vmatprep.subr.mxu0 0.0
    %130 = vmatpush2.msra.mxu0 0.0
    %131 = vmatprep.mubr.f32.mxu0 0.0
    %132 = vmatmul.mubr.f32.gmra.mxu0 %v65
    %v133 = vpop.f32.mrf.mxu0
    %v134 = vadd.f32 %v61, %v133
    %v135 = vpop.f32.mrf.mxu0
    %136 = vdwg.mxu0
    %v137 = vmax.f32 %v134, 0.0
    %v138 = vld [vmem:[%s3] sm:$0xff]
    %v139 = vld [vmem:[%s3 + $0x8] sm:$0xff]
    %v140 = vld [vmem:[%s3 + $0x10] sm:$0xff]
    %v141 = vld [vmem:[%s3 + $0x18] sm:$0xff]
    %v142 = vld [vmem:[%s3 + $0x20] sm:$0xff]
    %v143 = vld [vmem:[%s3 + $0x28] sm:$0xff]
    %v144 = vld [vmem:[%s3 + $0x30] sm:$0xff]
    %v145 = vld [vmem:[%s3 + $0x38] sm:$0xff]
    %v146 = vld [vmem:[%s3 + $0x40] sm:$0xff]
    %v147 = vld [vmem:[%s3 + $0x48] sm:$0xff]
    %v148 = vld [vmem:[%s3 + $0x50] sm:$0xff]
    %v149 = vld [vmem:[%s3 + $0x58] sm:$0xff]
    %v150 = vld [vmem:[%s3 + $0x60] sm:$0xff]
    %v151 = vld [vmem:[%s3 + $0x68] sm:$0xff]
    %v152 = vld [vmem:[%s3 + $0x70] sm:$0xff]
    %v153 = vld [vmem:[%s3 + $0x78] sm:$0xff]
    %v154 = vld [vmem:[#allocation5] sm:$0x1]
    %v156 = vlaneseq
    %v157 = vshrl.u32 %v156, 7
    %v158 = vsub.s32 0, %v157
    %v159 = vrot.slane %v154, %v158
    %161 = vmatprep.subr.mxu0 0.0
    %162 = vmatpush1.msra.mxu0 %v153
    %163 = vmatprep.subr.mxu0 0.0
    %164 = vmatpush1.msra.mxu0 %v152
    %165 = vmatprep.subr.mxu0 0.0
    %166 = vmatpush1.msra.mxu0 %v151
    %167 = vmatprep.subr.mxu0 0.0
    %168 = vmatpush1.msra.mxu0 %v150
    %169 = vmatprep.subr.mxu0 0.0
    %170 = vmatpush1.msra.mxu0 %v149
    %171 = vmatprep.subr.mxu0 0.0
    %172 = vmatpush1.msra.mxu0 %v148
    %173 = vmatprep.subr.mxu0 0.0
    %174 = vmatpush1.msra.mxu0 %v147
    %175 = vmatprep.subr.mxu0 0.0
    %176 = vmatpush1.msra.mxu0 %v146
    %177 = vmatprep.subr.mxu0 0.0
    %178 = vmatpush1.msra.mxu0 %v145
    %179 = vmatprep.subr.mxu0 0.0
    %180 = vmatpush1.msra.mxu0 %v144
    %181 = vmatprep.subr.mxu0 0.0
    %182 = vmatpush1.msra.mxu0 %v143
    %183 = vmatprep.subr.mxu0 0.0
    %184 = vmatpush1.msra.mxu0 %v142
    %185 = vmatprep.subr.mxu0 0.0
    %186 = vmatpush1.msra.mxu0 %v141
    %187 = vmatprep.subr.mxu0 0.0
    %188 = vmatpush1.msra.mxu0 %v140
    %189 = vmatprep.subr.mxu0 0.0
    %190 = vmatpush1.msra.mxu0 %v139
    %191 = vmatprep.subr.mxu0 0.0
    %192 = vmatpush1.msra.mxu0 %v138
    %193 = vmatprep.subr.mxu0 0.0
    %194 = vmatpush2.msra.mxu0 0.0
    %195 = vmatprep.subr.mxu0 0.0
    %196 = vmatpush2.msra.mxu0 0.0
    %197 = vmatprep.subr.mxu0 0.0
    %198 = vmatpush2.msra.mxu0 0.0
    %199 = vmatprep.subr.mxu0 0.0
    %200 = vmatpush2.msra.mxu0 0.0
    %201 = vmatprep.subr.mxu0 0.0
    %202 = vmatpush2.msra.mxu0 0.0
    %203 = vmatprep.subr.mxu0 0.0
    %204 = vmatpush2.msra.mxu0 0.0
    %205 = vmatprep.subr.mxu0 0.0
    %206 = vmatpush2.msra.mxu0 0.0
    %207 = vmatprep.subr.mxu0 0.0
    %208 = vmatpush2.msra.mxu0 0.0
    %209 = vmatprep.subr.mxu0 0.0
    %210 = vmatpush2.msra.mxu0 0.0
    %211 = vmatprep.subr.mxu0 0.0
    %212 = vmatpush2.msra.mxu0 0.0
    %213 = vmatprep.subr.mxu0 0.0
    %214 = vmatpush2.msra.mxu0 0.0
    %215 = vmatprep.subr.mxu0 0.0
    %216 = vmatpush2.msra.mxu0 0.0
    %217 = vmatprep.subr.mxu0 0.0
    %218 = vmatpush2.msra.mxu0 0.0
    %219 = vmatprep.subr.mxu0 0.0
    %220 = vmatpush2.msra.mxu0 0.0
    %221 = vmatprep.subr.mxu0 0.0
    %222 = vmatpush2.msra.mxu0 0.0
    %223 = vmatprep.subr.mxu0 0.0
    %224 = vmatpush2.msra.mxu0 0.0
    %225 = vmatprep.mubr.f32.mxu0 0.0
    %226 = vmatmul.mubr.f32.gmra.mxu0 %v137
    %v227 = vpop.f32.mrf.mxu0
    %v228 = vadd.f32 %v159, %v227
    %v229 = vpop.f32.mrf.mxu0
    %230 = vdwg.mxu0
    %v231 = vmax.f32 %v228, 0.0
    %v232 = vld [vmem:[%s5] sm:$0xff]
    %v233 = vld [vmem:[%s5 + $0x8] sm:$0xff]
    %v234 = vld [vmem:[%s5 + $0x10] sm:$0xff]
    %v235 = vld [vmem:[%s5 + $0x18] sm:$0xff]
    %v236 = vld [vmem:[%s5 + $0x20] sm:$0xff]
    %v237 = vld [vmem:[%s5 + $0x28] sm:$0xff]
    %v238 = vld [vmem:[%s5 + $0x30] sm:$0xff]
    %v239 = vld [vmem:[%s5 + $0x38] sm:$0xff]
    %v240 = vld [vmem:[%s5 + $0x40] sm:$0xff]
    %v241 = vld [vmem:[%s5 + $0x48] sm:$0xff]
    %v242 = vld [vmem:[%s5 + $0x50] sm:$0xff]
    %v243 = vld [vmem:[%s5 + $0x58] sm:$0xff]
    %v244 = vld [vmem:[%s5 + $0x60] sm:$0xff]
    %v245 = vld [vmem:[%s5 + $0x68] sm:$0xff]
    %v246 = vld [vmem:[%s5 + $0x70] sm:$0xff]
    %v247 = vld [vmem:[%s5 + $0x78] sm:$0xff]
    %v248 = vld [vmem:[%s6] sm:$0x1]
    %v250 = vlaneseq
    %v251 = vshrl.u32 %v250, 7
    %v252 = vsub.s32 0, %v251
    %v253 = vrot.slane %v248, %v252
    %255 = vmatprep.subr.mxu0 0.0
    %256 = vmatpush1.msra.mxu0 %v247
    %257 = vmatprep.subr.mxu0 0.0
    %258 = vmatpush1.msra.mxu0 %v246
    %259 = vmatprep.subr.mxu0 0.0
    %260 = vmatpush1.msra.mxu0 %v245
    %261 = vmatprep.subr.mxu0 0.0
    %262 = vmatpush1.msra.mxu0 %v244
    %263 = vmatprep.subr.mxu0 0.0
    %264 = vmatpush1.msra.mxu0 %v243
    %265 = vmatprep.subr.mxu0 0.0
    %266 = vmatpush1.msra.mxu0 %v242
    %267 = vmatprep.subr.mxu0 0.0
    %268 = vmatpush1.msra.mxu0 %v241
    %269 = vmatprep.subr.mxu0 0.0
    %270 = vmatpush1.msra.mxu0 %v240
    %271 = vmatprep.subr.mxu0 0.0
    %272 = vmatpush1.msra.mxu0 %v239
    %273 = vmatprep.subr.mxu0 0.0
    %274 = vmatpush1.msra.mxu0 %v238
    %275 = vmatprep.subr.mxu0 0.0
    %276 = vmatpush1.msra.mxu0 %v237
    %277 = vmatprep.subr.mxu0 0.0
    %278 = vmatpush1.msra.mxu0 %v236
    %279 = vmatprep.subr.mxu0 0.0
    %280 = vmatpush1.msra.mxu0 %v235
    %281 = vmatprep.subr.mxu0 0.0
    %282 = vmatpush1.msra.mxu0 %v234
    %283 = vmatprep.subr.mxu0 0.0
    %284 = vmatpush1.msra.mxu0 %v233
    %285 = vmatprep.subr.mxu0 0.0
    %286 = vmatpush1.msra.mxu0 %v232
    %287 = vmatprep.subr.mxu0 0.0
    %288 = vmatpush2.msra.mxu0 0.0
    %289 = vmatprep.subr.mxu0 0.0
    %290 = vmatpush2.msra.mxu0 0.0
    %291 = vmatprep.subr.mxu0 0.0
    %292 = vmatpush2.msra.mxu0 0.0
    %293 = vmatprep.subr.mxu0 0.0
    %294 = vmatpush2.msra.mxu0 0.0
    %295 = vmatprep.subr.mxu0 0.0
    %296 = vmatpush2.msra.mxu0 0.0
    %297 = vmatprep.subr.mxu0 0.0
    %298 = vmatpush2.msra.mxu0 0.0
    %299 = vmatprep.subr.mxu0 0.0
    %300 = vmatpush2.msra.mxu0 0.0
    %301 = vmatprep.subr.mxu0 0.0
    %302 = vmatpush2.msra.mxu0 0.0
    %303 = vmatprep.subr.mxu0 0.0
    %304 = vmatpush2.msra.mxu0 0.0
    %305 = vmatprep.subr.mxu0 0.0
    %306 = vmatpush2.msra.mxu0 0.0
    %307 = vmatprep.subr.mxu0 0.0
    %308 = vmatpush2.msra.mxu0 0.0
    %309 = vmatprep.subr.mxu0 0.0
    %310 = vmatpush2.msra.mxu0 0.0
    %311 = vmatprep.subr.mxu0 0.0
    %312 = vmatpush2.msra.mxu0 0.0
    %313 = vmatprep.subr.mxu0 0.0
    %314 = vmatpush2.msra.mxu0 0.0
    %315 = vmatprep.subr.mxu0 0.0
    %316 = vmatpush2.msra.mxu0 0.0
    %317 = vmatprep.subr.mxu0 0.0
    %318 = vmatpush2.msra.mxu0 0.0
    %319 = vmatprep.mubr.f32.mxu0 0.0
    %320 = vmatmul.mubr.f32.gmra.mxu0 %v231
    %v321 = vpop.f32.mrf.mxu0
    %v322 = vadd.f32 %v253, %v321
    %v323 = vpop.f32.mrf.mxu0
    %324 = vdwg.mxu0
    %vm325 = vcmask 64512
    %326 = vst.msk [vmem:[#allocation7] sm:$0xff] %vm325, %v322
    // Predicated region
    $region38: #{tpu_custom_call.1} parent=1 // pred_check
      _
    $region39: #{tpu_custom_call.1} parent=1 // pred_check_branch
      %328 = sbr.rel (0) target = $region41
    $region40: #{tpu_custom_call.1} parent=1 // pred_region
      %s330 = ssub.s32 128, 128
      %331 = vsyncadd [#allocation4], %s330
      %s333 = sshll.u32 [#allocation7], 4
      %s334 = int_to_ptr.vmem [resolvable:$true] %s333
      %336 = dma.vmem_to_hbm [thread:$0]  %s334, 128, %s7, [#allocation4]
    $region41: #{tpu_custom_call.1} parent=1 // pred_fallthru
      _
    // Predicated region
    $region42: #{tpu_custom_call.1} parent=1 // pred_check
      _
    $region43: #{tpu_custom_call.1} parent=1 // pred_check_branch
      %338 = sbr.rel (0) target = $region45
    $region44: #{tpu_custom_call.1} parent=1 // pred_region
      %339 = dma.done [#allocation4], 128
    $region45: #{tpu_custom_call.1} parent=1 // pred_fallthru
      _
    %340 = vsyncpa [#allocation3], 1
    %341 = vsyncpa [#allocation6], 1
    %342 = vsyncpa [#allocation4], 1

</llo_original>
